<compile_context>
chip_gen: v7x
topology: tpu7x:2x2x1
jax: 0.10.0
libtpu: 0.0.40
codegen_flags: <defaults>
</compile_context>

<pallas_src>
import functools

import jax
import jax.numpy as jnp
from jax.experimental import pallas as pl
from jax.experimental.pallas import tpu as pltpu

_LANES = 128
_BLOCK_ROWS = 8192                    # 8192 x 128 x f32 = 4 MiB per input block
_VMEM_LIMIT_BYTES = 40 * 1024 * 1024  # covers 3 streams x 2 bufs x 4 MiB + slack
_MEAN_PARALLEL = 2                    # leading 'parallel' slices (v7x: 2 TCs)


def _stable_bce(x, t):
    """max(x,0) - x*t + log(1 + exp(-|x|))  ==  x*(1-t) + log(1 + exp(-x)).

    Algebraically identical to the module's
        x_max + log(exp(-x_max) + exp(-x - x_max)) + x*(1 - t)   (x_max == x)
    but without that form's overflow for |x| >~ 44.  Two EUP transcendentals
    per element; the extra VALU ops are free filler under HBM slack.  (log1p
    would be marginally more precise, but the log argument lives in [1, 2]
    where plain log is well-conditioned and lowering is maximally portable.)
    """
    return jnp.maximum(x, 0.0) - x * t + jnp.log(1.0 + jnp.exp(-jnp.abs(x)))


def _bce_mean_kernel(x_ref, t_ref, out_ref, *, n_valid):
    """Grid step (p, k): add this block's masked per-lane sums into slice p."""
    p = pl.program_id(0)   # parallel slice (sharded across TCs on v7x)
    k = pl.program_id(1)   # sequential block within the slice (accumulator)
    nk = pl.num_programs(1)

    @pl.when(k == 0)
    def _init():
        out_ref[...] = jnp.zeros_like(out_ref)   # per-slice (1,128) accumulator

    x = x_ref[...].astype(jnp.float32)
    t = t_ref[...].astype(jnp.float32)
    loss = _stable_bce(x, t)

    rows, cols = loss.shape
    local = (jax.lax.broadcasted_iota(jnp.int32, (rows, cols), 0) * cols
             + jax.lax.broadcasted_iota(jnp.int32, (rows, cols), 1))
    # Global flat offset of this block, from the UNclamped block index, so
    # slop iterations (whose index_map got clamped) and padded / OOB tails
    # are masked to a zero contribution.
    # TODO(synk): int32 index math overflows for N >= 2**31 elements.
    start = (p * nk + k) * (rows * cols)
    remaining = n_valid - start
    out_ref[...] += jnp.sum(jnp.where(local < remaining, loss, 0.0),
                            axis=0, keepdims=True)


def _bce_none_kernel(x_ref, t_ref, o_ref):
    """Element-wise (reduction='none') loss on one lane-dense row block."""
    x = x_ref[...].astype(jnp.float32)
    t = t_ref[...].astype(jnp.float32)
    o_ref[...] = _stable_bce(x, t).astype(o_ref.dtype)   # store in input dtype


def _to_slab(v):
    """Flatten and view as a lane-dense (rows, 128) slab.

    Free (no copy) whenever the element count is a multiple of 128; otherwise
    a pad copy is made (see TODO(synk) in the header) and the pad is masked /
    sliced away.
    """
    flat = jnp.ravel(v)
    n = flat.shape[0]
    rem = (-n) % _LANES
    if rem:
        flat = jnp.pad(flat, (0, rem))
    return flat.reshape(-1, _LANES), n, rem


def bce_with_logits_loss(logits, targets, reduction="mean", *,
                         block_rows=_BLOCK_ROWS):
    """Pallas implementation of the reference BCEWithLogitsLoss.forward."""
    block_rows = max(8, (block_rows // 8) * 8)          # second-minor multiple of 8
    x_slab, n, rem = _to_slab(logits)
    t_slab, _, _ = _to_slab(targets)
    rows = x_slab.shape[0]
    # Full-array block when small (any row count allowed); otherwise a fixed
    # multiple-of-8 row block (edge blocks handled by the in-kernel mask).
    br = rows if rows <= block_rows else block_rows
    nb = pl.cdiv(rows, br)
    cparams = dict(vmem_limit_bytes=_VMEM_LIMIT_BYTES)

    if reduction == "mean":
        p_dim = _MEAN_PARALLEL if nb >= _MEAN_PARALLEL else 1
        k_dim = pl.cdiv(nb, p_dim)

        def block_index(p, k):
            # Clamp so slop iterations (p*k_dim + k >= nb) stay in bounds;
            # the in-kernel validity mask zeroes their contribution.
            return (jnp.minimum(p * k_dim + k, nb - 1), 0)

        partials = pl.pallas_call(
            functools.partial(_bce_mean_kernel, n_valid=n),
            out_shape=jax.ShapeDtypeStruct((p_dim, _LANES), jnp.float32),
            grid_spec=pltpu.PrefetchScalarGridSpec(
                num_scalar_prefetch=0,
                grid=(p_dim, k_dim),
                in_specs=[
                    pl.BlockSpec((br, _LANES), block_index),
                    pl.BlockSpec((br, _LANES), block_index),
                ],
                out_specs=pl.BlockSpec((1, _LANES), lambda p, k: (p, 0)),
            ),
            compiler_params=pltpu.CompilerParams(
                dimension_semantics=("parallel", "arbitrary"), **cparams),
        )(x_slab, t_slab)
        # Tiny (p_dim, 128) cross-slice reduction + mean finalize outside.
        mean = jnp.sum(partials) / n
        return mean.astype(jnp.float32).reshape(1)   # torch: (N,1).mean(0) -> (1,)

    # reduction == 'none' (or anything else): per-element loss of shape (N, 1)
    out = pl.pallas_call(
        _bce_none_kernel,
        out_shape=jax.ShapeDtypeStruct((rows, _LANES), logits.dtype),
        grid_spec=pltpu.PrefetchScalarGridSpec(
            num_scalar_prefetch=0,
            grid=(nb,),
            in_specs=[
                pl.BlockSpec((br, _LANES), lambda i: (i, 0)),
                pl.BlockSpec((br, _LANES), lambda i: (i, 0)),
            ],
            out_specs=pl.BlockSpec((br, _LANES), lambda i: (i, 0)),
        ),
        compiler_params=pltpu.CompilerParams(
            dimension_semantics=("parallel",), **cparams),
    )(x_slab, t_slab)
    if rem:
        # Ragged N: drop the padded tail (the slice only copies in this case).
        return out.reshape(-1)[:n].reshape(n, 1)
    return out.reshape(n, 1)


def _reference(logits, targets, reduction="mean"):
    """Pure-JAX mirror of the PyTorch module's forward (the spec)."""
    x = jnp.ravel(logits).astype(jnp.float32)[:, None]
    t = jnp.ravel(targets).astype(jnp.float32)[:, None]
    x_max = jnp.max(x, axis=1, keepdims=True)
    a = jnp.exp(-x_max)
    z = a + jnp.exp(-x - x_max)
    loss = x_max + jnp.log(z) + x * (1.0 - t)
    if reduction == "mean":
        loss = loss.mean(0)
    return loss


if __name__ == "__main__":
    key = jax.random.PRNGKey(0)

    cases = [
        ((2, 4, 16, 16), {}),                     # N = 2048: aligned, 1 block
        ((3, 5, 7, 11), {}),                      # N = 1155: ragged tail
        ((2, 16, 16, 16), {"block_rows": 16}),    # N = 8192: 2x2 grid, no slop
        ((3, 16, 128), {"block_rows": 16}),       # N = 6144: nb=3 -> slop block
        ((5, 7, 99), {"block_rows": 8}),          # ragged + multi-block + slop
    ]

    for idx, (shape, kw) in enumerate(cases):
        k1, k2 = jax.random.split(jax.random.fold_in(key, idx))
        x = jax.random.normal(k1, shape, dtype=jnp.float32)            # logits
        t = jax.random.bernoulli(k2, 0.5, shape).astype(jnp.float32)   # targets

        got_mean = jax.block_until_ready(
            bce_with_logits_loss(x, t, reduction="mean", **kw))
        got_none = jax.block_until_ready(
            bce_with_logits_loss(x, t, reduction="none", **kw))

        ref_mean = _reference(x, t, reduction="mean")
        ref_none = _reference(x, t, reduction="none")

        n = x.size
        assert got_mean.shape == (1,), (shape, got_mean.shape)
        assert got_none.shape == (n, 1), (shape, got_none.shape)
        assert jnp.allclose(got_mean, ref_mean, rtol=1e-5, atol=1e-5), shape
        assert jnp.allclose(got_none, ref_none, rtol=1e-5, atol=1e-5), shape

    print("KERNEL_OK")
</pallas_src>

<mosaic_0001>
module attributes {stable_mosaic.version = 11 : i64} {
  func.func @_bce_mean_kernel(%arg0: i32, %arg1: i32, %arg2: memref<16x128xf32, #tpu.memory_space<vmem>>, %arg3: memref<16x128xf32, #tpu.memory_space<vmem>>, %arg4: memref<1x128xf32, #tpu.memory_space<vmem>>) attributes {dimension_semantics = [#tpu.dimension_semantics<parallel>, #tpu.dimension_semantics<arbitrary>], iteration_bounds = array<i64: 1, 1>, scalar_prefetch = 0 : i64, scratch_operands = 0 : i64, tpu.core_type = #tpu.core_type<tc>, window_params = [{transform_indices = @transform_0, window_bounds = array<i64: 16, 128>}, {transform_indices = @transform_1, window_bounds = array<i64: 16, 128>}, {transform_indices = @transform_2, window_bounds = array<i64: 1, 128>}]} {
    %c0_i32 = arith.constant 0 : i32
    %0 = arith.cmpi eq, %arg1, %c0_i32 : i32
    %1 = arith.extui %0 : i1 to i32
    %c0_i32_0 = arith.constant 0 : i32
    %2 = arith.cmpi ne, %1, %c0_i32_0 : i32
    scf.if %2 {
      %cst_13 = arith.constant 0.000000e+00 : f32
      %35 = vector.broadcast %cst_13 : f32 to vector<1x128xf32>
      %c0_14 = arith.constant 0 : index
      %c0_15 = arith.constant 0 : index
      %36 = vector.load %arg4[%c0_14, %c0_15] : memref<1x128xf32, #tpu.memory_space<vmem>>, vector<1x128xf32>
      tpu.vector_store %arg4[%c0_14, %c0_15], %35 {strides = array<i32>} : memref<1x128xf32, #tpu.memory_space<vmem>>, vector<1x128xf32>,
    } else {
    }
    %c0 = arith.constant 0 : index
    %c0_1 = arith.constant 0 : index
    %3 = vector.load %arg2[%c0, %c0_1] : memref<16x128xf32, #tpu.memory_space<vmem>>, vector<16x128xf32>
    %c0_2 = arith.constant 0 : index
    %c0_3 = arith.constant 0 : index
    %4 = vector.load %arg3[%c0_2, %c0_3] : memref<16x128xf32, #tpu.memory_space<vmem>>, vector<16x128xf32>
    %cst = arith.constant 0.000000e+00 : f32
    %5 = vector.broadcast %cst : f32 to vector<16x128xf32>
    %6 = arith.maximumf %3, %5 : vector<16x128xf32>
    %7 = arith.mulf %3, %4 : vector<16x128xf32>
    %8 = arith.subf %6, %7 : vector<16x128xf32>
    %9 = math.absf %3 : vector<16x128xf32>
    %cst_4 = arith.constant 0.000000e+00 : f32
    %10 = vector.broadcast %cst_4 : f32 to vector<16x128xf32>
    %11 = arith.subf %10, %9 : vector<16x128xf32>
    %12 = math.exp %11 : vector<16x128xf32>
    %cst_5 = arith.constant 1.000000e+00 : f32
    %13 = vector.broadcast %cst_5 : f32 to vector<16x128xf32>
    %14 = arith.addf %13, %12 : vector<16x128xf32>
    %15 = math.log %14 : vector<16x128xf32>
    %16 = arith.addf %8, %15 : vector<16x128xf32>
    %17 = tpu.iota {dimensions = array<i32: 0>} : vector<16x128xi32>
    %c128_i32 = arith.constant 128 : i32
    %18 = vector.broadcast %c128_i32 : i32 to vector<16x128xi32>
    %19 = arith.muli %17, %18 : vector<16x128xi32>
    %20 = tpu.iota {dimensions = array<i32: 1>} : vector<16x128xi32>
    %21 = arith.addi %19, %20 : vector<16x128xi32>
    %c1_i32 = arith.constant 1 : i32
    %22 = arith.muli %arg0, %c1_i32 : i32
    %23 = arith.addi %22, %arg1 : i32
    %c2048_i32 = arith.constant 2048 : i32
    %24 = arith.muli %23, %c2048_i32 : i32
    %c2048_i32_6 = arith.constant 2048 : i32
    %25 = arith.subi %c2048_i32_6, %24 : i32
    %c0_7 = arith.constant 0 : index
    %c0_8 = arith.constant 0 : index
    %26 = vector.load %arg4[%c0_7, %c0_8] : memref<1x128xf32, #tpu.memory_space<vmem>>, vector<1x128xf32>
    %27 = vector.broadcast %25 : i32 to vector<16x128xi32>
    %28 = arith.cmpi slt, %21, %27 : vector<16x128xi32>
    %cst_9 = arith.constant 0.000000e+00 : f32
    %29 = vector.broadcast %cst_9 : f32 to vector<16x128xf32>
    %30 = arith.select %28, %16, %29 : vector<16x128xi1>, vector<16x128xf32>
    %cst_10 = arith.constant dense<0.000000e+00> : vector<128xf32>
    %31 = vector.multi_reduction <add>, %30, %cst_10 [0] : vector<16x128xf32> to vector<128xf32>
    %32 = vector.shape_cast %31 : vector<128xf32> to vector<1x128xf32>
    %33 = arith.addf %26, %32 : vector<1x128xf32>
    %c0_11 = arith.constant 0 : index
    %c0_12 = arith.constant 0 : index
    %34 = vector.load %arg4[%c0_11, %c0_12] : memref<1x128xf32, #tpu.memory_space<vmem>>, vector<1x128xf32>
    tpu.vector_store %arg4[%c0_11, %c0_12], %33 {strides = array<i32>} : memref<1x128xf32, #tpu.memory_space<vmem>>, vector<1x128xf32>,
    return
  }
  func.func @transform_0(%arg0: i32, %arg1: i32) -> (i32, i32) {
    %c1_i32 = arith.constant 1 : i32
    %0 = arith.muli %arg0, %c1_i32 : i32
    %1 = arith.addi %0, %arg1 : i32
    %c0_i32 = arith.constant 0 : i32
    %2 = arith.minsi %1, %c0_i32 : i32
    %c0_i32_0 = arith.constant 0 : i32
    %c0_i32_1 = arith.constant 0 : i32
    return %2, %c0_i32_0 : i32, i32
  }
  func.func @transform_1(%arg0: i32, %arg1: i32) -> (i32, i32) {
    %c1_i32 = arith.constant 1 : i32
    %0 = arith.muli %arg0, %c1_i32 : i32
    %1 = arith.addi %0, %arg1 : i32
    %c0_i32 = arith.constant 0 : i32
    %2 = arith.minsi %1, %c0_i32 : i32
    %c0_i32_0 = arith.constant 0 : i32
    %c0_i32_1 = arith.constant 0 : i32
    return %2, %c0_i32_0 : i32, i32
  }
  func.func @transform_2(%arg0: i32, %arg1: i32) -> (i32, i32) {
    %c0_i32 = arith.constant 0 : i32
    %c0_i32_0 = arith.constant 0 : i32
    return %arg0, %c0_i32 : i32, i32
  }
}

</mosaic_0001>

<llo_original>
// kernel: tpu_custom_call.1
$region0: #{tpu_custom_call.1}
  #allocation0 [shape = 'u32[]', space=smem, size = 0x4, offset = 0x4, fixed_abs, tag = 'smem constant byte address 0x4 - core index']
  #allocation1 [shape = 'u32[144,128]{1,0:T(1,128)}', space=vmem, size = 0x12000, scoped, tag = 'internal scratch']
  %s0 = inlined_call_operand.hbm [shape: f32[16,128], index: 0, kind: input, shape index: {}]
  %s1 = inlined_call_operand.hbm [shape: f32[16,128], index: 1, kind: input, shape index: {}]
  %s2 = inlined_call_operand.hbm [shape: f32[1,128], index: 2, kind: output, shape index: {}]
  %s3 = sld [smem:[#allocation0]]
  $region30: #{tpu_custom_call.1} parent=0
    _
  %s5 = ssub.s32 1, %s3
  %s6 = scalar_select 0, %s5, %s3
  $region1: #{tpu_custom_call.1} parent=0
    #allocation2 [shape = 'u8[8192]{0}', space=vmem, size = 0x2000, scoped, tag = 'input window, operand 0, single buffered']
    #allocation3 [shape = 's32[1]{0}', space=sflag, size = 0x4, scoped, tag = 'scoped memory for tpu_custom_call.1']
    #allocation4 [shape = 's32[1]{0}', space=sflag, size = 0x4, scoped, tag = 'scoped memory for tpu_custom_call.1']
    #allocation5 [shape = 'u8[8192]{0}', space=vmem, size = 0x2000, scoped, tag = 'input window, operand 1, single buffered']
    #allocation6 [shape = 's32[1]{0}', space=sflag, size = 0x4, scoped, tag = 'scoped memory for tpu_custom_call.1']
    #allocation7 [shape = 'u8[512]{0}', space=vmem, size = 0x400, scoped, tag = 'output window, operand 0, single buffered']
    %7 = vsyncpa [#allocation3], 0
    %8 = vsyncpa [#allocation6], 0
    %9 = vsyncpa [#allocation4], 0
    // Predicated region
    $region2: #{tpu_custom_call.1} parent=1 // pred_check
      _
    $region3: #{tpu_custom_call.1} parent=1 // pred_check_branch
      %11 = sbr.rel (0) target = $region5
    $region4: #{tpu_custom_call.1} parent=1 // pred_region
      %s12 = sadd.s32 0, 0
      %p13 = scmp.lt.s32.totalorder %s12, 0
      %s14 = scalar_select %p13, %s12, 0
      %s15 = smul.u32 2, %s14
      %s17 = ssub.s32 256, 256
      %18 = vsyncadd [#allocation3], %s17
      %s19 = smul.addr %s15, 128
      %s20 = scalar_lea.hbm %s0, %s19
      %s21 = sshll.u32 [#allocation2], 4
      %s22 = int_to_ptr.vmem [resolvable:$true] %s21
      %27 = dma.hbm_to_vmem [thread:$0]  %s20, 256, %s22, [#allocation3], 128, 128, 8
    $region5: #{tpu_custom_call.1} parent=1 // pred_fallthru
      _
    // Predicated region
    $region6: #{tpu_custom_call.1} parent=1 // pred_check
      _
    $region7: #{tpu_custom_call.1} parent=1 // pred_check_branch
      %29 = sbr.rel (0) target = $region9
    $region8: #{tpu_custom_call.1} parent=1 // pred_region
      %s30 = sadd.s32 0, 0
      %p31 = scmp.lt.s32.totalorder %s30, 0
      %s32 = scalar_select %p31, %s30, 0
      %s33 = smul.u32 2, %s32
      %s35 = ssub.s32 256, 256
      %36 = vsyncadd [#allocation6], %s35
      %s37 = smul.addr %s33, 128
      %s38 = scalar_lea.hbm %s1, %s37
      %s39 = sshll.u32 [#allocation5], 4
      %s40 = int_to_ptr.vmem [resolvable:$true] %s39
      %45 = dma.hbm_to_vmem [thread:$0]  %s38, 256, %s40, [#allocation6], 128, 128, 8
    $region9: #{tpu_custom_call.1} parent=1 // pred_fallthru
      _
    // Predicated region
    $region10: #{tpu_custom_call.1} parent=1 // pred_check
      _
    $region11: #{tpu_custom_call.1} parent=1 // pred_check_branch
      %47 = sbr.rel (0) target = $region13
    $region12: #{tpu_custom_call.1} parent=1 // pred_region
      %48 = dma.done [#allocation3], 256
    $region13: #{tpu_custom_call.1} parent=1 // pred_fallthru
      _
    // Predicated region
    $region14: #{tpu_custom_call.1} parent=1 // pred_check
      _
    $region15: #{tpu_custom_call.1} parent=1 // pred_check_branch
      %50 = sbr.rel (0) target = $region17
    $region16: #{tpu_custom_call.1} parent=1 // pred_region
      %51 = dma.done [#allocation6], 256
    $region17: #{tpu_custom_call.1} parent=1 // pred_fallthru
      _
    %s52 = sadd.s32 0, 0
    %p53 = scmp.lt.s32.totalorder %s52, 0
    %s54 = scalar_select %p53, %s52, 0
    %s55 = smul.u32 2, %s54
    %s56 = sadd.s32 0, 0
    %p57 = scmp.lt.s32.totalorder %s56, 0
    %s58 = scalar_select %p57, %s56, 0
    %s59 = smul.u32 2, %s58
    %p60 = scmp.eq.s32.totalorder 0, 0
    // Predicated region
    $region18: #{tpu_custom_call.1} parent=1 // pred_check
      %p61 = pneg %p60
    $region19: #{tpu_custom_call.1} parent=1 // pred_check_branch
      %63 = sbr.rel (%p61) target = $region21
    $region20: #{tpu_custom_call.1} parent=1 // pred_region
      %64 = vst [vmem:[#allocation7] sm:$0x1] 0.0
    $region21: #{tpu_custom_call.1} parent=1 // pred_fallthru
      _
    %v65 = vld [vmem:[#allocation2] sm:$0xff]
    %v66 = vld [vmem:[#allocation2 + $0x8] sm:$0xff]
    %v67 = vld [vmem:[#allocation5] sm:$0xff]
    %v68 = vld [vmem:[#allocation5 + $0x8] sm:$0xff]
    %v69 = vmax.f32 %v65, 0.0
    %v70 = vmax.f32 %v66, 0.0
    %v71 = vmul.f32 %v65, %v67
    %v72 = vmul.f32 %v66, %v68
    %v73 = vsub.f32 %v69, %v71
    %v74 = vsub.f32 %v70, %v72
    %v75 = vand.u32 2147483647, %v65
    %v76 = vand.u32 2147483647, %v66
    %v77 = vsub.f32 0.0, %v75
    %v78 = vsub.f32 0.0, %v76
    %v79 = vmul.f32 %v77, 1.442695
    %v80 = vpow.pop %v79
    %v81 = vmul.f32 %v78, 1.442695
    %v82 = vpow.pop %v81
    %v83 = vadd.f32 %v80, 1.0
    %v84 = vadd.f32 %v82, 1.0
    %v85 = vlog2.pop %v83
    %v86 = vmul.f32 %v85, 0.6931472
    %v87 = vlog2.pop %v84
    %v88 = vmul.f32 %v87, 0.6931472
    %v89 = vadd.f32 %v73, %v86
    %v90 = vadd.f32 %v74, %v88
    %v91 = vlaneseq
    %v92 = vshrl.u32 %v91, 7
    %v93 = vadd.s32 %v92, 8
    %v94 = vmul.u32 %v92, 128
    %v95 = vmul.u32 %v93, 128
    %v96 = vlaneseq
    %v97 = vand.u32 %v96, 127
    %v98 = vadd.s32 %v94, %v97
    %v99 = vadd.s32 %v95, %v97
    %s100 = sadd.s32 0, 0
    %s101 = smul.u32 %s100, 2048
    %s102 = ssub.s32 2048, %s101
    %v103 = vld [vmem:[#allocation7] sm:$0x1]
    %v104 = vstv %s102
    %vm105 = vcmp.lt.s32.totalorder %v98, %v104
    %vm106 = vcmp.lt.s32.totalorder %v99, %v104
    %v107 = vsel %vm105, %v89, 0.0
    %v108 = vsel %vm106, %v90, 0.0
    %v109 = vadd.f32 %v107, %v108
    %v110 = vrot.slane %v109, 4
    %v111 = vadd.f32 %v109, %v110
    %v112 = vrot.slane %v111, 2
    %v113 = vadd.f32 %v111, %v112
    %v114 = vrot.slane %v113, 1
    %v115 = vadd.f32 %v113, %v114
    %v116 = vadd.f32 %v103, %v115
    %117 = vst [vmem:[#allocation7] sm:$0x1] %v116
    // Predicated region
    $region22: #{tpu_custom_call.1} parent=1 // pred_check
      _
    $region23: #{tpu_custom_call.1} parent=1 // pred_check_branch
      %119 = sbr.rel (0) target = $region25
    $region24: #{tpu_custom_call.1} parent=1 // pred_region
      %s121 = ssub.s32 16, 16
      %122 = vsyncadd [#allocation4], %s121
      %s124 = sshll.u32 [#allocation7], 4
      %s125 = int_to_ptr.vmem [resolvable:$true] %s124
      %127 = dma.vmem_to_hbm [thread:$0]  %s125, 16, %s2, [#allocation4]
    $region25: #{tpu_custom_call.1} parent=1 // pred_fallthru
      _
    // Predicated region
    $region26: #{tpu_custom_call.1} parent=1 // pred_check
      _
    $region27: #{tpu_custom_call.1} parent=1 // pred_check_branch
      %129 = sbr.rel (0) target = $region29
    $region28: #{tpu_custom_call.1} parent=1 // pred_region
      %130 = dma.done [#allocation4], 16
    $region29: #{tpu_custom_call.1} parent=1 // pred_fallthru
      _
    %131 = vsyncpa [#allocation3], 1
    %132 = vsyncpa [#allocation6], 1
    %133 = vsyncpa [#allocation4], 1

</llo_original>
